<compile_context>
chip_gen: v7x
topology: tpu7x:2x2x1
jax: 0.10.0
libtpu: 0.0.40
codegen_flags: <defaults>
</compile_context>

<pallas_src>
import functools

import jax
import jax.numpy as jnp
from jax.experimental import pallas as pl
from jax.experimental.pallas import tpu as pltpu


# ----------------------------------------------------------------------------
# VMEM sizing (per chip generation)
#   v5e/v6e: 128 MiB physical -> 96 MiB scoped limit, ~72 MiB of streamed tiles
#   v7x    :  64 MiB physical -> 48 MiB scoped limit, ~36 MiB of streamed tiles
# ----------------------------------------------------------------------------
@functools.lru_cache(maxsize=None)
def _vmem_limit_bytes():
    try:
        cap = int(pltpu.get_tpu_info().vmem_capacity_bytes)
    except Exception:                      # info unavailable -> assume smallest (v7x)
        cap = 64 * 1024 * 1024
    return min((cap * 3) // 4, 96 * 1024 * 1024)


def _tile_budget_bytes():
    # Headroom inside the scoped limit for compiler scratch, semaphores, small blocks.
    return (_vmem_limit_bytes() * 3) // 4


def _pick_row_tile(n_rows, n_streams, itemsize):
    """Largest sublane-aligned (multiple-of-8) row count for (rows, 128) tiles such
    that `n_streams` double-buffered copies fit in the tile budget.  Tiles are
    already sublane/lane dense, so the footprint math is exact."""
    if n_rows <= 8:
        return n_rows                                     # single full-extent block
    per_row = n_streams * 2 * 128 * itemsize              # x2 = double buffering
    max_rows = max(8, (_tile_budget_bytes() // per_row) // 8 * 8)
    return min(max_rows, (n_rows // 8) * 8)


def _pad_to_lanes(x2d):
    """Zero-pad the feature axis of (B, D) to a multiple of 128 lanes.
    Fallback copy, only taken when D % 128 != 0 (never in the demo)."""
    d = x2d.shape[1]
    d_pad = ((d + 127) // 128) * 128
    if d_pad != d:
        x2d = jnp.pad(x2d, ((0, 0), (0, d_pad - d)))
    return x2d, d_pad


# ----------------------------------------------------------------------------
# Kernel 1: WGAN-GP interpolation  interp = alpha*real + (1-alpha)*fake
# ----------------------------------------------------------------------------
def _interp_kernel(alpha_ref, real_ref, fake_ref, out_ref):
    b = pl.program_id(0)
    a = alpha_ref[b]                      # per-sample alpha: scalar read from SMEM
    real = real_ref[...]                  # (St, 128) sublane/lane-dense tile
    fake = fake_ref[...]
    # alpha*real + (1-alpha)*fake == fake + alpha*(real - fake): 1 sub + 1 FMA / elem.
    # f32 inputs run cast-free; bf16 inputs promote to f32 (safe on v5e, which has
    # no bf16 VPU path; the kernel is HBM-bound either way).
    out_ref[...] = (fake + a * (real - fake)).astype(out_ref.dtype)


def interpolate(alpha, real, fake):
    """interp = alpha*real + (1-alpha)*fake, streamed through VMEM in dense tiles."""
    assert real.shape == fake.shape and real.ndim == 2
    B, D = real.shape
    real_p, d_pad = _pad_to_lanes(real)
    fake_p, _ = _pad_to_lanes(fake)
    S = d_pad // 128
    r3 = real_p.reshape(B, S, 128)        # free reshape: sublane/lane-dense view
    f3 = fake_p.reshape(B, S, 128)
    itemsize = jnp.dtype(real.dtype).itemsize
    St = _pick_row_tile(S, n_streams=3, itemsize=itemsize)   # real + fake + out
    nj = pl.cdiv(S, St)
    a1 = alpha.reshape(B).astype(jnp.float32)

    out = pl.pallas_call(
        _interp_kernel,
        out_shape=jax.ShapeDtypeStruct((B, S, 128), real.dtype),
        grid_spec=pltpu.PrefetchScalarGridSpec(
            num_scalar_prefetch=0,
            grid=(B, nj),
            in_specs=[
                pl.BlockSpec(memory_space=pltpu.MemorySpace.SMEM),       # alpha (B,)
                pl.BlockSpec((None, St, 128), lambda b, j: (b, j, 0)),   # real
                pl.BlockSpec((None, St, 128), lambda b, j: (b, j, 0)),   # fake
            ],
            out_specs=pl.BlockSpec((None, St, 128), lambda b, j: (b, j, 0)),
        ),
        compiler_params=pltpu.CompilerParams(
            dimension_semantics=("parallel", "parallel"),
            vmem_limit_bytes=_vmem_limit_bytes(),
        ),
    )(a1, r3, f3)

    out = out.reshape(B, d_pad)
    return out[:, :D] if d_pad != D else out


# ----------------------------------------------------------------------------
# Kernel 2: gradient penalty  per-row (||g_row||_2 - 1)^2  (mean taken in wrapper)
# ----------------------------------------------------------------------------
def _gp_kernel(g_ref, o_ref, acc_ref, *, valid_rows, tile_rows, fold, need_tail):
    j = pl.program_id(1)
    last = pl.num_programs(1) - 1

    @pl.when(j == 0)
    def _():
        acc_ref[...] = jnp.zeros_like(acc_ref)

    def accumulate(mask_tail):
        g = g_ref[...].astype(jnp.float32)               # (tile_rows, 128)
        if mask_tail:                                    # static: emitted once, last step
            row = j * tile_rows + jax.lax.broadcasted_iota(jnp.int32, g.shape, 0)
            g = jnp.where(row < valid_rows, g, 0.0)
        gsq = g * g
        if fold:
            # Fold the tile into the narrow (8, 128) accumulator with pure VPU adds
            # (reshape follows the native (8, 128) tiling -> no relayout, no XLU).
            acc_ref[...] += jnp.sum(gsq.reshape(tile_rows // 8, 8, 128), axis=0)
        else:
            acc_ref[...] += gsq

    if need_tail:
        @pl.when(j != last)
        def _():
            accumulate(False)                            # unmasked steady state

        @pl.when(j == last)
        def _():
            accumulate(True)                             # ragged tail: mask only here
    else:
        accumulate(False)

    @pl.when(j == last)
    def _():
        ssq = jnp.sum(acc_ref[...])                      # single cross-lane/sublane reduce
        pen = (jnp.sqrt(ssq) - 1.0) ** 2
        o_ref[...] = jnp.full((1, 128), pen, jnp.float32)   # lane-dense store


def gradient_penalty(grads):
    """mean over rows of (||grads.reshape(B, -1)_row||_2 - 1)^2 via a Pallas kernel."""
    B = grads.shape[0]
    g2d = grads.reshape(B, -1)                           # mirrors gradients.view(batch, -1)
    g2d, d_pad = _pad_to_lanes(g2d)                      # zero pad adds nothing to ||.||^2
    S = d_pad // 128
    g3 = g2d.reshape(B, S, 128)
    itemsize = jnp.dtype(g2d.dtype).itemsize
    St = _pick_row_tile(S, n_streams=1, itemsize=itemsize)
    nj = pl.cdiv(S, St)
    fold = S > 8                                         # St is a multiple of 8 iff S > 8
    acc_rows = 8 if fold else S
    need_tail = (nj * St != S)

    kernel = functools.partial(_gp_kernel, valid_rows=S, tile_rows=St,
                               fold=fold, need_tail=need_tail)
    pen = pl.pallas_call(
        kernel,
        out_shape=jax.ShapeDtypeStruct((B, 1, 128), jnp.float32),
        grid_spec=pltpu.PrefetchScalarGridSpec(
            num_scalar_prefetch=0,
            grid=(B, nj),
            in_specs=[pl.BlockSpec((None, St, 128), lambda b, j: (b, j, 0))],
            out_specs=pl.BlockSpec((None, 1, 128), lambda b, j: (b, 0, 0)),
            scratch_shapes=[pltpu.VMEM((acc_rows, 128), jnp.float32)],
        ),
        compiler_params=pltpu.CompilerParams(
            dimension_semantics=("parallel", "arbitrary"),   # batch across TCs (v7x)
            vmem_limit_bytes=_vmem_limit_bytes(),
        ),
    )(g3)
    return jnp.mean(pen[:, 0, 0])                        # tiny (B,) mean, fused by XLA


# ----------------------------------------------------------------------------
# Discriminator stand-in + full forward
# ----------------------------------------------------------------------------
def linear_discriminator(params, x):
    # Stand-in for the external `discriminator` nn.Module: one linear layer mapping
    # (B, D) -> (B, 1) scores.  Kept in plain JAX because the gradient-penalty path
    # must be differentiated through it.
    return x @ params["w"] + params["b"]


def adversarial_loss_forward(generator_output, disc_params, real_data=None, *,
                             alpha=None,
                             discriminator_weight=0.1,
                             gradient_penalty_weight=10.0):
    fake_scores = linear_discriminator(disc_params, generator_output)
    # (B, 1) reduce in plain JAX: a dedicated pallas_call here is pure launch/DMA
    # overhead (perf feedback); XLA fuses it into the discriminator matmul.
    total = -jnp.mean(fake_scores)

    if real_data is not None:
        fake = jax.lax.stop_gradient(generator_output)            # .detach()
        interp = interpolate(alpha, real_data, fake)              # Pallas streaming kernel
        # TODO(synk): torch.autograd.grad through an arbitrary discriminator module has
        # no Pallas equivalent; the gradient is obtained with jax.vjp of the JAX disc.
        # (For a JAX-traceable discriminator the interpolation could instead be inlined
        # in jnp so XLA fuses it into the first matmul and skips one HBM round trip.)
        disc_fn = lambda z: linear_discriminator(disc_params, z)
        scores, vjp_fn = jax.vjp(disc_fn, interp)
        (grads,) = vjp_fn(jnp.ones_like(scores))
        gp = gradient_penalty(grads)                              # Pallas reduction kernel
        total = total + gradient_penalty_weight * gp
    # TODO(synk): forward-only port; custom_vjp for the Pallas kernels would be needed
    # to take jax.grad of this loss end-to-end.
    return total * discriminator_weight


def adversarial_loss_ref(generator_output, disc_params, real_data=None, *,
                         alpha=None, discriminator_weight=0.1,
                         gradient_penalty_weight=10.0):
    fake_scores = linear_discriminator(disc_params, generator_output)
    total = -jnp.mean(fake_scores)
    if real_data is not None:
        fake = jax.lax.stop_gradient(generator_output)
        interp = alpha * real_data + (1.0 - alpha) * fake
        disc_fn = lambda z: linear_discriminator(disc_params, z)
        s, vjp_fn = jax.vjp(disc_fn, interp)
        (g,) = vjp_fn(jnp.ones_like(s))
        g = g.reshape(g.shape[0], -1)
        gp = jnp.mean((jnp.linalg.norm(g, axis=1) - 1.0) ** 2)
        total = total + gradient_penalty_weight * gp
    return total * discriminator_weight


if __name__ == "__main__":
    key = jax.random.PRNGKey(0)
    k_gen, k_real, k_w, k_b, k_alpha = jax.random.split(key, 5)

    # batch=2 samples, each a flattened (channels=4, 16x16) map -> 1024 features;
    # discriminator: 1024 -> 1.
    B, D = 2, 4 * 16 * 16
    generator_output = jax.random.normal(k_gen, (B, D), dtype=jnp.float32)
    real_data = jax.random.normal(k_real, (B, D), dtype=jnp.float32)
    disc_params = {
        "w": jax.random.normal(k_w, (D, 1), dtype=jnp.float32) / (D ** 0.5),
        "b": jax.random.normal(k_b, (1,), dtype=jnp.float32) * 0.1,
    }
    # Deterministic stand-in for torch.rand(batch, 1) inside compute_gradient_penalty.
    alpha = jax.random.uniform(k_alpha, (B, 1), dtype=jnp.float32)

    dw, gpw = 0.1, 10.0

    out_full = jax.block_until_ready(adversarial_loss_forward(
        generator_output, disc_params, real_data, alpha=alpha,
        discriminator_weight=dw, gradient_penalty_weight=gpw))
    out_gen_only = jax.block_until_ready(adversarial_loss_forward(
        generator_output, disc_params, None, alpha=None,
        discriminator_weight=dw, gradient_penalty_weight=gpw))

    ref_full = adversarial_loss_ref(
        generator_output, disc_params, real_data, alpha=alpha,
        discriminator_weight=dw, gradient_penalty_weight=gpw)
    ref_gen_only = adversarial_loss_ref(
        generator_output, disc_params, None, alpha=None,
        discriminator_weight=dw, gradient_penalty_weight=gpw)

    # Also validate the standalone interpolation kernel.
    interp_out = jax.block_until_ready(interpolate(alpha, real_data, generator_output))
    interp_ref = alpha * real_data + (1.0 - alpha) * generator_output

    assert jnp.allclose(out_full, ref_full, rtol=1e-5, atol=1e-5), (out_full, ref_full)
    assert jnp.allclose(out_gen_only, ref_gen_only, rtol=1e-5, atol=1e-6), (
        out_gen_only, ref_gen_only)
    assert jnp.allclose(interp_out, interp_ref, rtol=1e-5, atol=1e-5)

    print("KERNEL_OK")
</pallas_src>

<mosaic_0001>
module attributes {stable_mosaic.version = 11 : i64} {
  func.func @_interp_kernel(%arg0: i32, %arg1: i32, %arg2: memref<2xf32, #tpu.memory_space<smem>>, %arg3: memref<1x8x128xf32, #tpu.memory_space<vmem>>, %arg4: memref<1x8x128xf32, #tpu.memory_space<vmem>>, %arg5: memref<1x8x128xf32, #tpu.memory_space<vmem>>) attributes {dimension_semantics = [#tpu.dimension_semantics<parallel>, #tpu.dimension_semantics<parallel>], iteration_bounds = array<i64: 2, 1>, scalar_prefetch = 0 : i64, scratch_operands = 0 : i64, tpu.core_type = #tpu.core_type<tc>, window_params = [{transform_indices = @transform_0, window_bounds = array<i64: 2>}, {transform_indices = @transform_1, window_bounds = array<i64: 1, 8, 128>}, {transform_indices = @transform_2, window_bounds = array<i64: 1, 8, 128>}, {transform_indices = @transform_3, window_bounds = array<i64: 1, 8, 128>}]} {
    %0 = arith.index_cast %arg0 : i32 to index
    %1 = memref.load %arg2[%0] : memref<2xf32, #tpu.memory_space<smem>>
    %c0 = arith.constant 0 : index
    %c0_0 = arith.constant 0 : index
    %c0_1 = arith.constant 0 : index
    %2 = vector.load %arg3[%c0, %c0_0, %c0_1] : memref<1x8x128xf32, #tpu.memory_space<vmem>>, vector<1x8x128xf32>
    %3 = vector.shape_cast %2 : vector<1x8x128xf32> to vector<8x128xf32>
    %c0_2 = arith.constant 0 : index
    %c0_3 = arith.constant 0 : index
    %c0_4 = arith.constant 0 : index
    %4 = vector.load %arg4[%c0_2, %c0_3, %c0_4] : memref<1x8x128xf32, #tpu.memory_space<vmem>>, vector<1x8x128xf32>
    %5 = vector.shape_cast %4 : vector<1x8x128xf32> to vector<8x128xf32>
    %6 = arith.subf %3, %5 : vector<8x128xf32>
    %7 = vector.broadcast %1 : f32 to vector<8x128xf32>
    %8 = arith.mulf %7, %6 : vector<8x128xf32>
    %9 = arith.addf %5, %8 : vector<8x128xf32>
    %c0_5 = arith.constant 0 : index
    %c0_6 = arith.constant 0 : index
    %c0_7 = arith.constant 0 : index
    %10 = vector.load %arg5[%c0_5, %c0_6, %c0_7] : memref<1x8x128xf32, #tpu.memory_space<vmem>>, vector<1x8x128xf32>
    %11 = vector.shape_cast %10 : vector<1x8x128xf32> to vector<8x128xf32>
    %12 = vector.shape_cast %9 : vector<8x128xf32> to vector<1x8x128xf32>
    tpu.vector_store %arg5[%c0_5, %c0_6, %c0_7], %12 {strides = array<i32>} : memref<1x8x128xf32, #tpu.memory_space<vmem>>, vector<1x8x128xf32>,
    return
  }
  func.func @transform_0(%arg0: i32, %arg1: i32) -> i32 {
    %c0_i32 = arith.constant 0 : i32
    %c0_i32_0 = arith.constant 0 : i32
    return %c0_i32 : i32
  }
  func.func @transform_1(%arg0: i32, %arg1: i32) -> (i32, i32, i32) {
    %c0_i32 = arith.constant 0 : i32
    %c0_i32_0 = arith.constant 0 : i32
    return %arg0, %arg1, %c0_i32 : i32, i32, i32
  }
  func.func @transform_2(%arg0: i32, %arg1: i32) -> (i32, i32, i32) {
    %c0_i32 = arith.constant 0 : i32
    %c0_i32_0 = arith.constant 0 : i32
    return %arg0, %arg1, %c0_i32 : i32, i32, i32
  }
  func.func @transform_3(%arg0: i32, %arg1: i32) -> (i32, i32, i32) {
    %c0_i32 = arith.constant 0 : i32
    %c0_i32_0 = arith.constant 0 : i32
    return %arg0, %arg1, %c0_i32 : i32, i32, i32
  }
}

</mosaic_0001>

<llo_original>
// kernel: tpu_custom_call.1
$region0: #{tpu_custom_call.1}
  #allocation0 [shape = 'u32[]', space=smem, size = 0x4, offset = 0x4, fixed_abs, tag = 'smem constant byte address 0x4 - core index']
  #allocation1 [shape = 'u32[144,128]{1,0:T(1,128)}', space=vmem, size = 0x12000, scoped, tag = 'internal scratch']
  %s0 = inlined_call_operand.hbm [shape: f32[2], index: 0, kind: input, shape index: {}]
  %s1 = inlined_call_operand.hbm [shape: f32[2,8,128], index: 1, kind: input, shape index: {}]
  %s2 = inlined_call_operand.hbm [shape: f32[2,8,128], index: 2, kind: input, shape index: {}]
  %s3 = inlined_call_operand.hbm [shape: f32[2,8,128], index: 3, kind: output, shape index: {}]
  %s4 = sld [smem:[#allocation0]]
  $region57: #{tpu_custom_call.1} parent=0
    _
  %s6 = ssub.s32 1, %s4
  %s7 = scalar_select 0, %s6, %s4
  $region1: #{tpu_custom_call.1} parent=0
    #allocation2 [shape = 'u8[512]{0}', space=smem, size = 0x200, scoped, tag = 'input window, operand 0, single buffered']
    #allocation3 [shape = 's32[2]{0}', space=sflag, size = 0x8, scoped, tag = 'scoped memory for tpu_custom_call.1']
    #allocation4 [shape = 's32[2]{0}', space=sflag, size = 0x8, scoped, tag = 'scoped memory for tpu_custom_call.1']
    #allocation5 [shape = 's32[2]{0}', space=sflag, size = 0x8, scoped, tag = 'scoped memory for tpu_custom_call.1']
    #allocation6 [shape = 'u8[8192]{0}', space=vmem, size = 0x2000, scoped, tag = 'input window, operand 1']
    #allocation7 [shape = 'u8[8192]{0}', space=vmem, size = 0x2000, scoped, tag = 'input window, operand 2']
    #allocation8 [shape = 's32[2]{0}', space=sflag, size = 0x8, scoped, tag = 'scoped memory for tpu_custom_call.1']
    #allocation9 [shape = 'u8[8192]{0}', space=vmem, size = 0x2000, scoped, tag = 'output window, operand 0']
    %8 = vsyncpa [#allocation5], 0
    %9 = vsyncpa [#allocation3], 0
    %s10 = scalar_lea.sflag [#allocation3], 1
    %11 = vsyncpa %s10, 0
    %12 = vsyncpa [#allocation8], 0
    %s13 = scalar_lea.sflag [#allocation8], 1
    %14 = vsyncpa %s13, 0
    %15 = vsyncpa [#allocation4], 0
    %s16 = scalar_lea.sflag [#allocation4], 1
    %17 = vsyncpa %s16, 0
    loop: start=0, step=1, limit=4
    $region2: #{tpu_custom_call.1} parent=1 // loop_pre_header
      _
    $region3: #{tpu_custom_call.1} parent=1 // loop_header
      %s19 = sphi 0, %s23
      %p20 = scmp.ge.s32.totalorder %s19, 4
      %s26 = sphi 0, %s38
      %s27 = sphi 0, %s34
      %s28 = sphi 0, %s26
      %s29 = sphi 0, %s27
      %s30 = sphi 0, %s28
      %s31 = sphi 0, %s29
      %s39 = sphi 0, %s39
      %s41 = sphi 0, %s39
      %s42 = sphi 0, %s41
      %s56 = sphi 0, %s42
      %s64 = sphi 0, %s66
      %s67 = sphi 0, %s64
      %s68 = sphi 0, %s67
      %s84 = sphi 0, %s68
      %s92 = sphi 0, %s94
      %s95 = sphi 0, %s92
      %s96 = sphi 0, %s95
      %s112 = sphi 0, %s96
      %s120 = sphi 0, %s122
      %s123 = sphi 0, %s120
      %s124 = sphi 0, %s123
      %s140 = sphi 0, %s124
    $region4: #{tpu_custom_call.1} parent=1 // loop_header_branch
      %22 = sbr.rel (%p20) target = $region8
    $region5: #{tpu_custom_call.1} parent=1 // loop_body
      %s24 = ssub.s32 %s19, 1
      %s25 = ssub.s32 %s19, 2
      %s32 = sadd.s32 1, %s27
      %p33 = scmp.ge.s32.totalorder %s32, 1
      %s34 = scalar_select %p33, 0, %s32
      %s35 = sadd.s32 1, %s26
      %s36 = scalar_select %p33, %s35, %s26
      %p37 = scmp.ge.s32.totalorder %s36, 2
      %s38 = scalar_select %p37, 0, %s36
      %s40 = sadd.s32 %s39, 1
      %p43 = scmp.eq.s32.totalorder %s19, 1
      %p44 = scmp.ne.s32.totalorder %s39, %s41
      %p45 = scmp.eq.s32.totalorder %s19, 0
      %p46 = por %p44, %p45
      %p47 = scmp.ne.s32.totalorder %s39, %s41
      %p48 = scmp.eq.s32.totalorder %s24, 1
      %p49 = por %p47, %p48
      %p50 = scmp.ne.s32.totalorder %s41, %s42
      %p51 = scmp.eq.s32.totalorder %s24, 0
      %p52 = por %p50, %p51
      %p53 = scmp.ne.s32.totalorder %s41, %s42
      %p54 = scmp.eq.s32.totalorder %s25, 1
      %p55 = por %p53, %p54
      %p57 = scmp.ne.s32.totalorder %s42, %s56
      %p58 = scmp.eq.s32.totalorder %s25, 0
      %p59 = por %p57, %p58
      %s60 = ssub.s32 %s26, %s38
      %s61 = ssub.s32 %s27, %s34
      %s62 = sor.u32 %s60, %s61
      %p63 = scmp.eq.s32.totalorder %s62, 0
      %s65 = sadd.s32 %s64, 1
      %s66 = scalar_select %p63, %s64, %s65
      %p69 = pneg %p63
      %p70 = scmp.eq.s32.totalorder %s19, 1
      %p71 = por %p69, %p70
      %p72 = scmp.ne.s32.totalorder %s64, %s67
      %p73 = scmp.eq.s32.totalorder %s19, 0
      %p74 = por %p72, %p73
      %p75 = scmp.ne.s32.totalorder %s64, %s67
      %p76 = scmp.eq.s32.totalorder %s24, 1
      %p77 = por %p75, %p76
      %p78 = scmp.ne.s32.totalorder %s67, %s68
      %p79 = scmp.eq.s32.totalorder %s24, 0
      %p80 = por %p78, %p79
      %p81 = scmp.ne.s32.totalorder %s67, %s68
      %p82 = scmp.eq.s32.totalorder %s25, 1
      %p83 = por %p81, %p82
      %p85 = scmp.ne.s32.totalorder %s68, %s84
      %p86 = scmp.eq.s32.totalorder %s25, 0
      %p87 = por %p85, %p86
      %s88 = ssub.s32 %s26, %s38
      %s89 = ssub.s32 %s27, %s34
      %s90 = sor.u32 %s88, %s89
      %p91 = scmp.eq.s32.totalorder %s90, 0
      %s93 = sadd.s32 %s92, 1
      %s94 = scalar_select %p91, %s92, %s93
      %p97 = pneg %p91
      %p98 = scmp.eq.s32.totalorder %s19, 1
      %p99 = por %p97, %p98
      %p100 = scmp.ne.s32.totalorder %s92, %s95
      %p101 = scmp.eq.s32.totalorder %s19, 0
      %p102 = por %p100, %p101
      %p103 = scmp.ne.s32.totalorder %s92, %s95
      %p104 = scmp.eq.s32.totalorder %s24, 1
      %p105 = por %p103, %p104
      %p106 = scmp.ne.s32.totalorder %s95, %s96
      %p107 = scmp.eq.s32.totalorder %s24, 0
      %p108 = por %p106, %p107
      %p109 = scmp.ne.s32.totalorder %s95, %s96
      %p110 = scmp.eq.s32.totalorder %s25, 1
      %p111 = por %p109, %p110
      %p113 = scmp.ne.s32.totalorder %s96, %s112
      %p114 = scmp.eq.s32.totalorder %s25, 0
      %p115 = por %p113, %p114
      %s116 = ssub.s32 %s26, %s38
      %s117 = ssub.s32 %s27, %s34
      %s118 = sor.u32 %s116, %s117
      %p119 = scmp.eq.s32.totalorder %s118, 0
      %s121 = sadd.s32 %s120, 1
      %s122 = scalar_select %p119, %s120, %s121
      %p125 = pneg %p119
      %p126 = scmp.eq.s32.totalorder %s19, 1
      %p127 = por %p125, %p126
      %p128 = scmp.ne.s32.totalorder %s120, %s123
      %p129 = scmp.eq.s32.totalorder %s19, 0
      %p130 = por %p128, %p129
      %p131 = scmp.ne.s32.totalorder %s120, %s123
      %p132 = scmp.eq.s32.totalorder %s24, 1
      %p133 = por %p131, %p132
      %p134 = scmp.ne.s32.totalorder %s123, %s124
      %p135 = scmp.eq.s32.totalorder %s24, 0
      %p136 = por %p134, %p135
      %p137 = scmp.ne.s32.totalorder %s123, %s124
      %p138 = scmp.eq.s32.totalorder %s25, 1
      %p139 = por %p137, %p138
      %p141 = scmp.ne.s32.totalorder %s124, %s140
      %p142 = scmp.eq.s32.totalorder %s25, 0
      %p143 = por %p141, %p142
      %p144 = scmp.le.s32.totalorder 1, %s19
      %p145 = scmp.lt.s32.totalorder %s19, 3
      %p146 = pnand %p144, %p145
      %p147 = pneg %p146
      // Predicated region
      $region9: #{tpu_custom_call.1} parent=5 // pred_check
        _
      $region10: #{tpu_custom_call.1} parent=5 // pred_check_branch
        %149 = sbr.rel (%p146) target = $region12
      $region11: #{tpu_custom_call.1} parent=5 // pred_region
        %s150 = ssub.s32 %s19, 1
        // Predicated region
        $region13: #{tpu_custom_call.1} parent=11 // pred_check
          %p151 = pneg %p52
        $region14: #{tpu_custom_call.1} parent=11 // pred_check_branch
          %153 = sbr.rel (%p151) target = $region16
        $region15: #{tpu_custom_call.1} parent=11 // pred_region
          %s155 = ssub.s32 16, 16
          %156 = vsyncadd [#allocation5], %s155
          %159 = dma.hbm_to_smem %s0, 16, [#allocation2], [#allocation5]
        $region16: #{tpu_custom_call.1} parent=11 // pred_fallthru
          _
      $region12: #{tpu_custom_call.1} parent=5 // pred_fallthru
        _
      %p160 = scmp.lt.s32.totalorder %s19, 2
      // Predicated region
      $region17: #{tpu_custom_call.1} parent=5 // pred_check
        %p161 = pneg %p160
      $region18: #{tpu_custom_call.1} parent=5 // pred_check_branch
        %163 = sbr.rel (%p161) target = $region20
      $region19: #{tpu_custom_call.1} parent=5 // pred_region
        // Predicated region
        $region21: #{tpu_custom_call.1} parent=19 // pred_check
          %p164 = pneg %p74
        $region22: #{tpu_custom_call.1} parent=19 // pred_check_branch
          %166 = sbr.rel (%p164) target = $region24
        $region23: #{tpu_custom_call.1} parent=19 // pred_region
          %s167 = sand.u32 %s64, 1
          %s168 = scalar_lea.sflag [#allocation3], %s167
          %s169 = sand.u32 %s64, 1
          %s170 = smul.addr %s169, 8
          %s171 = scalar_lea.vmem [#allocation6], %s170
          %s173 = ssub.s32 128, 128
          %174 = vsyncadd %s168, %s173
          %s175 = sadd.s32 %s27, %s26
          %s176 = smul.addr %s175, 128
          %s177 = scalar_lea.hbm %s1, %s176
          %s179 = sshll.u32 %s171, 4
          %s180 = int_to_ptr.vmem [resolvable:$true] %s179
          %182 = dma.hbm_to_vmem [thread:$0]  %s177, 128, %s180, %s168
        $region24: #{tpu_custom_call.1} parent=19 // pred_fallthru
          _
        // Predicated region
        $region25: #{tpu_custom_call.1} parent=19 // pred_check
          %p183 = pneg %p102
        $region26: #{tpu_custom_call.1} parent=19 // pred_check_branch
          %185 = sbr.rel (%p183) target = $region28
        $region27: #{tpu_custom_call.1} parent=19 // pred_region
          %s186 = sand.u32 %s92, 1
          %s187 = scalar_lea.sflag [#allocation8], %s186
          %s188 = sand.u32 %s92, 1
          %s189 = smul.addr %s188, 8
          %s190 = scalar_lea.vmem [#allocation7], %s189
          %s192 = ssub.s32 128, 128
          %193 = vsyncadd %s187, %s192
          %s194 = sadd.s32 %s27, %s26
          %s195 = smul.addr %s194, 128
          %s196 = scalar_lea.hbm %s2, %s195
          %s198 = sshll.u32 %s190, 4
          %s199 = int_to_ptr.vmem [resolvable:$true] %s198
          %201 = dma.hbm_to_vmem [thread:$0]  %s196, 128, %s199, %s187
        $region28: #{tpu_custom_call.1} parent=19 // pred_fallthru
          _
      $region20: #{tpu_custom_call.1} parent=5 // pred_fallthru
        _
      %p202 = scmp.le.s32.totalorder 1, %s19
      %p203 = scmp.lt.s32.totalorder %s19, 3
      %p204 = pnand %p202, %p203
      %p205 = pneg %p204
      // Predicated region
      $region29: #{tpu_custom_call.1} parent=5 // pred_check
        _
      $region30: #{tpu_custom_call.1} parent=5 // pred_check_branch
        %207 = sbr.rel (%p204) target = $region32
      $region31: #{tpu_custom_call.1} parent=5 // pred_region
        %s208 = ssub.s32 %s19, 1
        // Predicated region
        $region33: #{tpu_custom_call.1} parent=31 // pred_check
          %p209 = pneg %p52
        $region34: #{tpu_custom_call.1} parent=31 // pred_check_branch
          %211 = sbr.rel (%p209) target = $region36
        $region35: #{tpu_custom_call.1} parent=31 // pred_region
          %212 = dma.done [#allocation5], 16
        $region36: #{tpu_custom_call.1} parent=31 // pred_fallthru
          _
        %s213 = sand.u32 %s67, 1
        %s214 = scalar_lea.sflag [#allocation3], %s213
        %s215 = sand.u32 %s67, 1
        %s216 = smul.addr %s215, 8
        %s217 = scalar_lea.vmem [#allocation6], %s216
        // Predicated region
        $region37: #{tpu_custom_call.1} parent=31 // pred_check
          %p218 = pneg %p80
        $region38: #{tpu_custom_call.1} parent=31 // pred_check_branch
          %220 = sbr.rel (%p218) target = $region40
        $region39: #{tpu_custom_call.1} parent=31 // pred_region
          %221 = dma.done %s214, 128
        $region40: #{tpu_custom_call.1} parent=31 // pred_fallthru
          _
        %s222 = sand.u32 %s95, 1
        %s223 = scalar_lea.sflag [#allocation8], %s222
        %s224 = sand.u32 %s95, 1
        %s225 = smul.addr %s224, 8
        %s226 = scalar_lea.vmem [#allocation7], %s225
        // Predicated region
        $region41: #{tpu_custom_call.1} parent=31 // pred_check
          %p227 = pneg %p108
        $region42: #{tpu_custom_call.1} parent=31 // pred_check_branch
          %229 = sbr.rel (%p227) target = $region44
        $region43: #{tpu_custom_call.1} parent=31 // pred_region
          %230 = dma.done %s223, 128
        $region44: #{tpu_custom_call.1} parent=31 // pred_fallthru
          _
        %231 = sfence
        %p232 = pneg %p52
        %p233 = pneg %p49
        %s234 = sand.u32 %s67, 1
        %s235 = scalar_lea.sflag [#allocation3], %s234
        %s236 = sand.u32 %s67, 1
        %s237 = smul.addr %s236, 8
        %s238 = scalar_lea.vmem [#allocation6], %s237
        %p239 = pneg %p80
        %p240 = pneg %p77
        %s241 = sand.u32 %s95, 1
        %s242 = scalar_lea.sflag [#allocation8], %s241
        %s243 = sand.u32 %s95, 1
        %s244 = smul.addr %s243, 8
        %s245 = scalar_lea.vmem [#allocation7], %s244
        %p246 = pneg %p108
        %p247 = pneg %p105
        %p248 = pneg %p136
        %p249 = pneg %p133
        %s250 = sand.u32 %s123, 1
        %s251 = scalar_lea.sflag [#allocation4], %s250
        %s252 = sand.u32 %s123, 1
        %s253 = smul.addr %s252, 8
        %s254 = scalar_lea.vmem [#allocation9], %s253
        %s255 = sld [smem:[#allocation2 + %s28]]
        %v256 = vld [vmem:[%s217] sm:$0xff]
        %v257 = vld [vmem:[%s226] sm:$0xff]
        %v258 = vsub.f32 %v256, %v257
        %v259 = vstv %s255
        %v260 = vmul.f32 %v259, %v258
        %v261 = vadd.f32 %v257, %v260
        %262 = vst [vmem:[%s254] sm:$0xff] %v261
        %s263 = sand.u32 %s123, 1
        %s264 = scalar_lea.sflag [#allocation4], %s263
        %s265 = sand.u32 %s123, 1
        %s266 = smul.addr %s265, 8
        %s267 = scalar_lea.vmem [#allocation9], %s266
        // Predicated region
        $region45: #{tpu_custom_call.1} parent=31 // pred_check
          %p268 = pneg %p133
        $region46: #{tpu_custom_call.1} parent=31 // pred_check_branch
          %270 = sbr.rel (%p268) target = $region48
        $region47: #{tpu_custom_call.1} parent=31 // pred_region
          %s272 = ssub.s32 128, 128
          %273 = vsyncadd %s264, %s272
          %s274 = sadd.s32 %s29, %s28
          %s275 = smul.addr %s274, 128
          %s276 = scalar_lea.hbm %s3, %s275
          %s278 = sshll.u32 %s267, 4
          %s279 = int_to_ptr.vmem [resolvable:$true] %s278
          %281 = dma.vmem_to_hbm [thread:$0]  %s279, 128, %s276, %s264
        $region48: #{tpu_custom_call.1} parent=31 // pred_fallthru
          _
      $region32: #{tpu_custom_call.1} parent=5 // pred_fallthru
        _
      %p282 = scmp.le.s32.totalorder 2, %s19
      // Predicated region
      $region49: #{tpu_custom_call.1} parent=5 // pred_check
        %p283 = pneg %p282
      $region50: #{tpu_custom_call.1} parent=5 // pred_check_branch
        %285 = sbr.rel (%p283) target = $region52
      $region51: #{tpu_custom_call.1} parent=5 // pred_region
        %s286 = ssub.s32 %s19, 2
        // Predicated region
        $region53: #{tpu_custom_call.1} parent=51 // pred_check
          %p287 = pneg %p139
        $region54: #{tpu_custom_call.1} parent=51 // pred_check_branch
          %289 = sbr.rel (%p287) target = $region56
        $region55: #{tpu_custom_call.1} parent=51 // pred_region
          %s290 = sand.u32 %s124, 1
          %s291 = scalar_lea.sflag [#allocation4], %s290
          %s292 = sand.u32 %s124, 1
          %s293 = smul.addr %s292, 8
          %s294 = scalar_lea.vmem [#allocation9], %s293
          %295 = dma.done %s291, 128
        $region56: #{tpu_custom_call.1} parent=51 // pred_fallthru
          _
      $region52: #{tpu_custom_call.1} parent=5 // pred_fallthru
        _
    $region6: #{tpu_custom_call.1} parent=1 // loop_footer
      %s23 = sadd.s32 1, %s19
    $region7: #{tpu_custom_call.1} parent=1 // loop_footer_branch
      %18 = sbr.rel target = $region3
    $region8: #{tpu_custom_call.1} parent=1 // loop_exit
      _
    %296 = vsyncpa [#allocation3], 1
    %s297 = scalar_lea.sflag [#allocation3], 1
    %298 = vsyncpa %s297, 1
    %299 = vsyncpa [#allocation8], 1
    %s300 = scalar_lea.sflag [#allocation8], 1
    %301 = vsyncpa %s300, 1
    %302 = vsyncpa [#allocation4], 1
    %s303 = scalar_lea.sflag [#allocation4], 1
    %304 = vsyncpa %s303, 1
    %305 = vsyncpa [#allocation5], 1
    %s306 = scalar_lea.sflag [#allocation5], 1
    %307 = vsyncpa %s306, 1

</llo_original>
